<compile_context>
chip_gen: v6e
topology: v6e:2x2x1
jax: 0.10.0
libtpu: 0.0.40
codegen_flags: <defaults>
</compile_context>

<pallas_src>
import numpy as np
import jax
import jax.numpy as jnp
from jax.experimental import pallas as pl
from jax.experimental.pallas import tpu as pltpu


# ----------------------------------------------------------------------------
# Stencil coefficients: zero-padded [-0.5, 0, 0.5] central difference along H
# and W on the flattened (H*W) lane axis.  Signs, 0.5 factors and boundary
# masks are folded into four per-lane coefficient rows (precomputed, resident).
# ----------------------------------------------------------------------------
def _stencil_coeffs(H, W):
    HW = H * W
    h = np.arange(HW, dtype=np.int64) // W
    w = np.arange(HW, dtype=np.int64) % W
    coef = np.stack([
        0.5 * (h < H - 1),     # multiplies roll(sx, HW - W)  ->  sx[h+1, w]
        -0.5 * (h > 0),        # multiplies roll(sx, W)       ->  sx[h-1, w]
        0.5 * (w < W - 1),     # multiplies roll(sy, HW - 1)  ->  sy[h, w+1]
        -0.5 * (w > 0),        # multiplies roll(sy, 1)       ->  sy[h, w-1]
    ]).astype(np.float32)
    return coef                                               # (4, HW)


# ----------------------------------------------------------------------------
# Fused Pallas kernel:
#   pp = p - dt * (gq - Dh(sqx) - Dw(sqy))
#   qp = q + dt * (gp - Dh(spx) - Dw(spy))
# Dh/Dw are the zero-padded central differences of the channel-summed
# gradients, broadcast over the C channels -- exactly what the constant-
# (out,in) conv3d ImageGradient in the PyTorch Integrator computes.
# ----------------------------------------------------------------------------
def _make_update_kernel(C, W, HW, folded):
    def stencil(coef_ref, sx, sy):
        # sx / sy: (td, HW).  Roll wrap-around lanes always hit zeroed
        # coefficients, so this matches the zero-padded conv exactly.
        gx = (coef_ref[0:1, :] * pltpu.roll(sx, HW - W, 1)
              + coef_ref[1:2, :] * pltpu.roll(sx, W, 1))
        gy = (coef_ref[2:3, :] * pltpu.roll(sy, HW - 1, 1)
              + coef_ref[3:4, :] * pltpu.roll(sy, 1, 1))
        return gx + gy

    def kernel(coef_ref, gq_ref, sqx_ref, sqy_ref, p_ref,
               gp_ref, spx_ref, spy_ref, q_ref, dt_ref,
               pp_ref, qp_ref):
        dt = dt_ref[0]
        adj_q = stencil(coef_ref, sqx_ref[...], sqy_ref[...])   # (td, HW)
        adj_p = stencil(coef_ref, spx_ref[...], spy_ref[...])
        if folded:
            # Big blocks are (C*D, HW), C-major rows: repeat the (D, HW)
            # stencil result over the C channel groups (sublane concat).
            adj_q = jnp.tile(adj_q, (C, 1))
            adj_p = jnp.tile(adj_p, (C, 1))
        else:
            # Big blocks are (C, td, HW): broadcast over the leading C dim.
            adj_q = adj_q[None, :, :]
            adj_p = adj_p[None, :, :]
        pp_ref[...] = p_ref[...] - dt * (gq_ref[...] - adj_q)
        qp_ref[...] = q_ref[...] + dt * (gp_ref[...] - adj_p)

    return kernel


def _vmem_plan():
    """(per-step block budget, vmem_limit_bytes), generation-aware."""
    phys = 64 * 1024 * 1024                      # conservative default (v7x size)
    try:
        phys = int(pltpu.get_tpu_info().vmem_capacity_bytes)
    except Exception:
        pass
    if phys >= 128 * 1024 * 1024:                # v5e / v6e: 128 MiB physical
        return 24 * 1024 * 1024, 64 * 1024 * 1024
    return 12 * 1024 * 1024, 48 * 1024 * 1024    # v7x: leave internal headroom


def _pick_td(D, C, HW, budget):
    """Largest divisor of D whose per-step blocks fit the budget (prefer x8)."""
    per_row = (6 * C + 4) * HW * 4               # 6 C-carrying + 4 summed tensors
    cap = max(1, budget // per_row)
    divisors = [t for t in range(1, D + 1) if D % t == 0 and t <= cap]
    mult8 = [t for t in divisors if t % 8 == 0]
    return max(mult8) if mult8 else max(divisors)


def _symplectic_updates(gq, sqx, sqy, p, gp, spx, spy, q, dt):
    """One fused pallas_call producing (pp, qp)."""
    B, C, D, H, W = p.shape
    HW = H * W
    # TODO(synk): for general H, W pad HW up to a multiple of 128 (lane-dense
    # stores); the shapes used here (HW = 256) are already lane-aligned.
    budget, vmem_limit = _vmem_plan()
    coef = jnp.asarray(_stencil_coeffs(H, W))                  # (4, HW) constant
    dt_arr = jnp.reshape(jnp.asarray(dt, jnp.float32), (1,))

    fold_bytes = ((6 * C + 4) * D + 4) * HW * 4                # one grid step
    folded = fold_bytes <= budget

    if folded:
        # Fold (C, D) into the sublane axis: full (8,128)-aligned tiles even
        # when D < 8 (demo: C*D = 8), unmasked stores, 1/4 the vreg waste.
        CD = C * D
        gq_r, gp_r = gq.reshape(B, CD, HW), gp.reshape(B, CD, HW)
        p_r, q_r = p.reshape(B, CD, HW), q.reshape(B, CD, HW)
        sqx_r, sqy_r = sqx.reshape(B, D, HW), sqy.reshape(B, D, HW)
        spx_r, spy_r = spx.reshape(B, D, HW), spy.reshape(B, D, HW)

        grid = (B,)
        semantics = ("parallel",)
        big = pl.BlockSpec((None, CD, HW), lambda b: (b, 0, 0))
        small = pl.BlockSpec((None, D, HW), lambda b: (b, 0, 0))
        coef_spec = pl.BlockSpec((4, HW), lambda b: (0, 0))    # resident
        kernel = _make_update_kernel(C, W, HW, folded=True)
    else:
        # Large-D fallback: tile D, keep channels as a leading block dim.
        td = _pick_td(D, C, HW, budget)
        nd = D // td
        gq_r, gp_r = gq.reshape(B, C, D, HW), gp.reshape(B, C, D, HW)
        p_r, q_r = p.reshape(B, C, D, HW), q.reshape(B, C, D, HW)
        sqx_r, sqy_r = sqx.reshape(B, D, HW), sqy.reshape(B, D, HW)
        spx_r, spy_r = spx.reshape(B, D, HW), spy.reshape(B, D, HW)

        # Larger parallel extent first so v7x megacore gets >=2 useful steps.
        if B >= nd:
            grid = (B, nd)
            bm = lambda b, d: (b, 0, d, 0)
            sm = lambda b, d: (b, d, 0)
            cm = lambda b, d: (0, 0)
        else:
            grid = (nd, B)
            bm = lambda d, b: (b, 0, d, 0)
            sm = lambda d, b: (b, d, 0)
            cm = lambda d, b: (0, 0)
        semantics = ("parallel", "parallel")
        big = pl.BlockSpec((None, C, td, HW), bm)
        small = pl.BlockSpec((None, td, HW), sm)
        coef_spec = pl.BlockSpec((4, HW), cm)
        kernel = _make_update_kernel(C, W, HW, folded=False)

    out_shape = (jax.ShapeDtypeStruct(p_r.shape, p.dtype),
                 jax.ShapeDtypeStruct(q_r.shape, q.dtype))
    # Note: no input_output_aliases -- p/q are un-donated jit parameters, so
    # aliasing would only force a defensive copy of the largest tensors.
    pp_r, qp_r = pl.pallas_call(
        kernel,
        out_shape=out_shape,
        grid=grid,
        in_specs=[coef_spec,
                  big, small, small, big,                       # gq, sqx, sqy, p
                  big, small, small, big,                       # gp, spx, spy, q
                  pl.BlockSpec(memory_space=pltpu.MemorySpace.SMEM)],  # dt
        out_specs=(big, big),
        compiler_params=pltpu.CompilerParams(
            dimension_semantics=semantics,
            vmem_limit_bytes=vmem_limit),
    )(coef, gq_r, sqx_r, sqy_r, p_r, gp_r, spx_r, spy_r, q_r, dt_arr)

    return pp_r.reshape(B, C, D, H, W), qp_r.reshape(B, C, D, H, W)


# ----------------------------------------------------------------------------
# Hamiltonian network (kept in XLA so jax.grad can differentiate through it,
# matching the PyTorch module's autograd-on-ham semantics).
# TODO(synk): the Hamiltonian fwd/bwd stays in XLA; a Pallas version would need
# a hand-written custom_vjp because the module differentiates through it.
# ----------------------------------------------------------------------------
def _central_diff(s, axis):
    """Zero-padded [-0.5, 0, 0.5] central difference along `axis`."""
    n = s.shape[axis]
    pad = [(0, 0)] * s.ndim
    pad[axis] = (1, 1)
    sp = jnp.pad(s, pad)
    hi = jax.lax.slice_in_dim(sp, 2, n + 2, axis=axis)
    lo = jax.lax.slice_in_dim(sp, 0, n, axis=axis)
    return 0.5 * (hi - lo)


def _image_gradient(x, pos):
    """ImageGradient: conv3d whose kernel is constant over (out,in) channel
    pairs == central difference of the channel sum, broadcast over channels."""
    s = jnp.sum(x, axis=1, keepdims=True)
    return jnp.broadcast_to(_central_diff(s, 3 if pos == 1 else 4), x.shape)


def _conv1x1_pad1(x, w, b):
    """PyTorch Conv3d(kernel_size=1, padding=1): zero-pad every spatial dim by
    1, then apply the pointwise channel mix (spatial dims grow by 2)."""
    xp = jnp.pad(x, ((0, 0), (0, 0), (1, 1), (1, 1), (1, 1)))
    return jnp.einsum("oc,bcdhw->bodhw", w, xp) + b[None, :, None, None, None]


def _ham_part(par, x, dxx, dxy):
    h = jnp.concatenate([x, dxx, dxy], axis=1)
    for i in (1, 2, 3, 4):                       # Dropout3d is unused in forward
        h = jax.nn.relu(_conv1x1_pad1(h, par[f"w{i}"], par[f"b{i}"]))
    return h                                      # (B, 1, D+8, H+8, W+8)


def _ham_grads(params, p, q):
    """Gradients of sum(ham) matching the PyTorch autograd calls: total d/dp,
    d/dq plus the partial d/d(dpx), d/d(dpy), d/d(dqx), d/d(dqy)."""
    def hsum(p_, q_, epx, epy, eqx, eqy):
        dpx = _image_gradient(p_, 1) + epx
        dpy = _image_gradient(p_, 2) + epy
        dqx = _image_gradient(q_, 1) + eqx
        dqy = _image_gradient(q_, 2) + eqy
        kin = _ham_part(params["kin"], p_, dpx, dpy)
        pot = _ham_part(params["pot"], q_, dqx, dqy)
        return jnp.sum(kin + pot)

    zero = jnp.zeros_like(p)
    return jax.grad(hsum, argnums=(0, 1, 2, 3, 4, 5))(p, q, zero, zero, zero, zero)


class PredictiveHamModel:
    """JAX/Pallas port of the PyTorch PredictiveHamModel forward pass."""
    # TODO(synk): the PyTorch Integrator calls variational_derivatives with a
    # mismatched arity (9 args vs 6 in its definition); implemented the evident
    # intent: varp from (p, dpx, dpy) grads, varq from (q, dqx, dqy) grads.

    def __init__(self, df, params):
        self.df = df
        self.params = params
        # p/q are reused by the caller, so we neither donate nor alias them.
        self._fwd = jax.jit(self._forward)

    def _forward(self, p, q, dt):
        gp, gq, gdpx, gdpy, gdqx, gdqy = _ham_grads(self.params, p, q)
        # Channel pre-sum (fuses with the grad in XLA): kernel streams C-x less.
        spx, spy = jnp.sum(gdpx, axis=1), jnp.sum(gdpy, axis=1)
        sqx, sqy = jnp.sum(gdqx, axis=1), jnp.sum(gdqy, axis=1)
        # Single fused Pallas call: pp = p - dt * varq ; qp = q + dt * varp.
        return _symplectic_updates(gq, sqx, sqy, p, gp, spx, spy, q, dt)

    def __call__(self, p, q, dt):
        return self._fwd(p, q, jnp.float32(dt))


# ----------------------------- pure-JAX reference ----------------------------
def _image_gradient_conv_ref(x, pos):
    C = x.shape[1]
    arr = np.array([-0.5, 0.0, 0.5], np.float32)
    if pos == 1:
        k = np.zeros((C, C, 1, 3, 1), np.float32); k[:, :, 0, :, 0] = arr
        pad = [(0, 0), (1, 1), (0, 0)]
    else:
        k = np.zeros((C, C, 1, 1, 3), np.float32); k[:, :, 0, 0, :] = arr
        pad = [(0, 0), (0, 0), (1, 1)]
    return jax.lax.conv_general_dilated(
        x, jnp.asarray(k), window_strides=(1, 1, 1), padding=pad,
        dimension_numbers=("NCDHW", "OIDHW", "NCDHW"),
        precision=jax.lax.Precision.HIGHEST)


def _reference(params, p, q, dt):
    gp, gq, gdpx, gdpy, gdqx, gdqy = _ham_grads(params, p, q)
    varp = gp - _image_gradient_conv_ref(gdpx, 1) - _image_gradient_conv_ref(gdpy, 2)
    varq = gq - _image_gradient_conv_ref(gdqx, 1) - _image_gradient_conv_ref(gdqy, 2)
    return p - dt * varq, q + dt * varp


def _init_ham_params(key, df):
    layer_dims = [(6 * df, 3 * df), (6 * df, 6 * df), (3 * df, 6 * df), (1, 3 * df)]

    def init_part(k):
        par = {}
        for i, (co, ci) in enumerate(layer_dims, start=1):
            k, kw, kb = jax.random.split(k, 3)
            bound = 1.0 / np.sqrt(ci)
            par[f"w{i}"] = jax.random.uniform(kw, (co, ci), jnp.float32, -bound, bound)
            par[f"b{i}"] = jax.random.uniform(kb, (co,), jnp.float32, -bound, bound)
        return par

    kkin, kpot = jax.random.split(key)
    return {"kin": init_part(kkin), "pot": init_part(kpot)}


if __name__ == "__main__":
    key = jax.random.PRNGKey(0)
    B, C, D, H, W = 2, 4, 2, 16, 16          # df = C = 4 ; C*D = 8 rows, HW = 256 lanes
    kp, kq, kw = jax.random.split(key, 3)
    p = jax.random.normal(kp, (B, C, D, H, W), jnp.float32)
    q = jax.random.normal(kq, (B, C, D, H, W), jnp.float32)
    params = _init_ham_params(kw, C)
    dt = 0.05

    model = PredictiveHamModel(df=C, params=params)
    pp, qp = model(p, q, dt)
    jax.block_until_ready((pp, qp))

    pr, qr = jax.jit(_reference)(params, p, q, jnp.float32(dt))
    ok = (bool(jnp.allclose(pp, pr, atol=2e-3, rtol=2e-3))
          and bool(jnp.allclose(qp, qr, atol=2e-3, rtol=2e-3)))
    if ok:
        print("KERNEL_OK")
    else:
        err_p = float(jnp.max(jnp.abs(pp - pr)))
        err_q = float(jnp.max(jnp.abs(qp - qr)))
        raise SystemExit(
            f"mismatch vs reference (max|dp|={err_p:.3e}, max|dq|={err_q:.3e})")
</pallas_src>

<mosaic_0001>
module attributes {stable_mosaic.version = 11 : i64} {
  func.func @kernel(%arg0: i32, %arg1: memref<4x256xf32, #tpu.memory_space<vmem>>, %arg2: memref<1x8x256xf32, #tpu.memory_space<vmem>>, %arg3: memref<1x2x256xf32, #tpu.memory_space<vmem>>, %arg4: memref<1x2x256xf32, #tpu.memory_space<vmem>>, %arg5: memref<1x8x256xf32, #tpu.memory_space<vmem>>, %arg6: memref<1x8x256xf32, #tpu.memory_space<vmem>>, %arg7: memref<1x2x256xf32, #tpu.memory_space<vmem>>, %arg8: memref<1x2x256xf32, #tpu.memory_space<vmem>>, %arg9: memref<1x8x256xf32, #tpu.memory_space<vmem>>, %arg10: memref<1xf32, #tpu.memory_space<smem>>, %arg11: memref<1x8x256xf32, #tpu.memory_space<vmem>>, %arg12: memref<1x8x256xf32, #tpu.memory_space<vmem>>) attributes {dimension_semantics = [#tpu.dimension_semantics<parallel>], iteration_bounds = array<i64: 2>, scalar_prefetch = 0 : i64, scratch_operands = 0 : i64, tpu.core_type = #tpu.core_type<tc>, window_params = [{pipeline_mode = #tpu.pipeline_mode<synchronous>, transform_indices = @transform_0, window_bounds = array<i64: 4, 256>}, {transform_indices = @transform_1, window_bounds = array<i64: 1, 8, 256>}, {transform_indices = @transform_2, window_bounds = array<i64: 1, 2, 256>}, {transform_indices = @transform_3, window_bounds = array<i64: 1, 2, 256>}, {transform_indices = @transform_4, window_bounds = array<i64: 1, 8, 256>}, {transform_indices = @transform_5, window_bounds = array<i64: 1, 8, 256>}, {transform_indices = @transform_6, window_bounds = array<i64: 1, 2, 256>}, {transform_indices = @transform_7, window_bounds = array<i64: 1, 2, 256>}, {transform_indices = @transform_8, window_bounds = array<i64: 1, 8, 256>}, {transform_indices = @transform_9, window_bounds = array<i64: 1>}, {transform_indices = @transform_10, window_bounds = array<i64: 1, 8, 256>}, {transform_indices = @transform_11, window_bounds = array<i64: 1, 8, 256>}]} {
    %c0 = arith.constant 0 : index
    %0 = memref.load %arg10[%c0] : memref<1xf32, #tpu.memory_space<smem>>
    %c0_0 = arith.constant 0 : index
    %c0_1 = arith.constant 0 : index
    %c0_2 = arith.constant 0 : index
    %1 = vector.load %arg3[%c0_0, %c0_1, %c0_2] : memref<1x2x256xf32, #tpu.memory_space<vmem>>, vector<1x2x256xf32>
    %2 = vector.shape_cast %1 : vector<1x2x256xf32> to vector<2x256xf32>
    %c0_3 = arith.constant 0 : index
    %c0_4 = arith.constant 0 : index
    %c0_5 = arith.constant 0 : index
    %3 = vector.load %arg4[%c0_3, %c0_4, %c0_5] : memref<1x2x256xf32, #tpu.memory_space<vmem>>, vector<1x2x256xf32>
    %4 = vector.shape_cast %3 : vector<1x2x256xf32> to vector<2x256xf32>
    %c0_6 = arith.constant 0 : index
    %c0_7 = arith.constant 0 : index
    %5 = vector.load %arg1[%c0_6, %c0_7] : memref<4x256xf32, #tpu.memory_space<vmem>>, vector<1x256xf32>
    %c240_i32 = arith.constant 240 : i32
    %6 = tpu.dynamic_rotate %2 by %c240_i32 dim 1 : vector<2x256xf32>, i32 -> vector<2x256xf32>
    %7 = vector.broadcast %5 : vector<1x256xf32> to vector<2x256xf32>
    %8 = arith.mulf %7, %6 : vector<2x256xf32>
    %c1 = arith.constant 1 : index
    %c0_8 = arith.constant 0 : index
    %9 = vector.load %arg1[%c1, %c0_8] : memref<4x256xf32, #tpu.memory_space<vmem>>, vector<1x256xf32>
    %c16_i32 = arith.constant 16 : i32
    %10 = tpu.dynamic_rotate %2 by %c16_i32 dim 1 : vector<2x256xf32>, i32 -> vector<2x256xf32>
    %11 = vector.broadcast %9 : vector<1x256xf32> to vector<2x256xf32>
    %12 = arith.mulf %11, %10 : vector<2x256xf32>
    %13 = arith.addf %8, %12 : vector<2x256xf32>
    %c2 = arith.constant 2 : index
    %c0_9 = arith.constant 0 : index
    %14 = vector.load %arg1[%c2, %c0_9] : memref<4x256xf32, #tpu.memory_space<vmem>>, vector<1x256xf32>
    %c255_i32 = arith.constant 255 : i32
    %15 = tpu.dynamic_rotate %4 by %c255_i32 dim 1 : vector<2x256xf32>, i32 -> vector<2x256xf32>
    %16 = vector.broadcast %14 : vector<1x256xf32> to vector<2x256xf32>
    %17 = arith.mulf %16, %15 : vector<2x256xf32>
    %c3 = arith.constant 3 : index
    %c0_10 = arith.constant 0 : index
    %18 = vector.load %arg1[%c3, %c0_10] : memref<4x256xf32, #tpu.memory_space<vmem>>, vector<1x256xf32>
    %c1_i32 = arith.constant 1 : i32
    %19 = tpu.dynamic_rotate %4 by %c1_i32 dim 1 : vector<2x256xf32>, i32 -> vector<2x256xf32>
    %20 = vector.broadcast %18 : vector<1x256xf32> to vector<2x256xf32>
    %21 = arith.mulf %20, %19 : vector<2x256xf32>
    %22 = arith.addf %17, %21 : vector<2x256xf32>
    %23 = arith.addf %13, %22 : vector<2x256xf32>
    %c0_11 = arith.constant 0 : index
    %c0_12 = arith.constant 0 : index
    %c0_13 = arith.constant 0 : index
    %24 = vector.load %arg7[%c0_11, %c0_12, %c0_13] : memref<1x2x256xf32, #tpu.memory_space<vmem>>, vector<1x2x256xf32>
    %25 = vector.shape_cast %24 : vector<1x2x256xf32> to vector<2x256xf32>
    %c0_14 = arith.constant 0 : index
    %c0_15 = arith.constant 0 : index
    %c0_16 = arith.constant 0 : index
    %26 = vector.load %arg8[%c0_14, %c0_15, %c0_16] : memref<1x2x256xf32, #tpu.memory_space<vmem>>, vector<1x2x256xf32>
    %27 = vector.shape_cast %26 : vector<1x2x256xf32> to vector<2x256xf32>
    %c0_17 = arith.constant 0 : index
    %c0_18 = arith.constant 0 : index
    %28 = vector.load %arg1[%c0_17, %c0_18] : memref<4x256xf32, #tpu.memory_space<vmem>>, vector<1x256xf32>
    %c240_i32_19 = arith.constant 240 : i32
    %29 = tpu.dynamic_rotate %25 by %c240_i32_19 dim 1 : vector<2x256xf32>, i32 -> vector<2x256xf32>
    %30 = vector.broadcast %28 : vector<1x256xf32> to vector<2x256xf32>
    %31 = arith.mulf %30, %29 : vector<2x256xf32>
    %c1_20 = arith.constant 1 : index
    %c0_21 = arith.constant 0 : index
    %32 = vector.load %arg1[%c1_20, %c0_21] : memref<4x256xf32, #tpu.memory_space<vmem>>, vector<1x256xf32>
    %c16_i32_22 = arith.constant 16 : i32
    %33 = tpu.dynamic_rotate %25 by %c16_i32_22 dim 1 : vector<2x256xf32>, i32 -> vector<2x256xf32>
    %34 = vector.broadcast %32 : vector<1x256xf32> to vector<2x256xf32>
    %35 = arith.mulf %34, %33 : vector<2x256xf32>
    %36 = arith.addf %31, %35 : vector<2x256xf32>
    %c2_23 = arith.constant 2 : index
    %c0_24 = arith.constant 0 : index
    %37 = vector.load %arg1[%c2_23, %c0_24] : memref<4x256xf32, #tpu.memory_space<vmem>>, vector<1x256xf32>
    %c255_i32_25 = arith.constant 255 : i32
    %38 = tpu.dynamic_rotate %27 by %c255_i32_25 dim 1 : vector<2x256xf32>, i32 -> vector<2x256xf32>
    %39 = vector.broadcast %37 : vector<1x256xf32> to vector<2x256xf32>
    %40 = arith.mulf %39, %38 : vector<2x256xf32>
    %c3_26 = arith.constant 3 : index
    %c0_27 = arith.constant 0 : index
    %41 = vector.load %arg1[%c3_26, %c0_27] : memref<4x256xf32, #tpu.memory_space<vmem>>, vector<1x256xf32>
    %c1_i32_28 = arith.constant 1 : i32
    %42 = tpu.dynamic_rotate %27 by %c1_i32_28 dim 1 : vector<2x256xf32>, i32 -> vector<2x256xf32>
    %43 = vector.broadcast %41 : vector<1x256xf32> to vector<2x256xf32>
    %44 = arith.mulf %43, %42 : vector<2x256xf32>
    %45 = arith.addf %40, %44 : vector<2x256xf32>
    %46 = arith.addf %36, %45 : vector<2x256xf32>
    %47 = tpu.concatenate %23, %23, %23, %23 in 0 : vector<2x256xf32>, vector<2x256xf32>, vector<2x256xf32>, vector<2x256xf32> -> vector<8x256xf32>
    %48 = tpu.concatenate %46, %46, %46, %46 in 0 : vector<2x256xf32>, vector<2x256xf32>, vector<2x256xf32>, vector<2x256xf32> -> vector<8x256xf32>
    %c0_29 = arith.constant 0 : index
    %c0_30 = arith.constant 0 : index
    %c0_31 = arith.constant 0 : index
    %49 = vector.load %arg5[%c0_29, %c0_30, %c0_31] : memref<1x8x256xf32, #tpu.memory_space<vmem>>, vector<1x8x256xf32>
    %50 = vector.shape_cast %49 : vector<1x8x256xf32> to vector<8x256xf32>
    %c0_32 = arith.constant 0 : index
    %c0_33 = arith.constant 0 : index
    %c0_34 = arith.constant 0 : index
    %51 = vector.load %arg2[%c0_32, %c0_33, %c0_34] : memref<1x8x256xf32, #tpu.memory_space<vmem>>, vector<1x8x256xf32>
    %52 = vector.shape_cast %51 : vector<1x8x256xf32> to vector<8x256xf32>
    %53 = arith.subf %52, %47 : vector<8x256xf32>
    %54 = vector.broadcast %0 : f32 to vector<8x256xf32>
    %55 = arith.mulf %54, %53 : vector<8x256xf32>
    %56 = arith.subf %50, %55 : vector<8x256xf32>
    %c0_35 = arith.constant 0 : index
    %c0_36 = arith.constant 0 : index
    %c0_37 = arith.constant 0 : index
    %57 = vector.load %arg11[%c0_35, %c0_36, %c0_37] : memref<1x8x256xf32, #tpu.memory_space<vmem>>, vector<1x8x256xf32>
    %58 = vector.shape_cast %57 : vector<1x8x256xf32> to vector<8x256xf32>
    %59 = vector.shape_cast %56 : vector<8x256xf32> to vector<1x8x256xf32>
    tpu.vector_store %arg11[%c0_35, %c0_36, %c0_37], %59 {strides = array<i32>} : memref<1x8x256xf32, #tpu.memory_space<vmem>>, vector<1x8x256xf32>,
    %c0_38 = arith.constant 0 : index
    %c0_39 = arith.constant 0 : index
    %c0_40 = arith.constant 0 : index
    %60 = vector.load %arg9[%c0_38, %c0_39, %c0_40] : memref<1x8x256xf32, #tpu.memory_space<vmem>>, vector<1x8x256xf32>
    %61 = vector.shape_cast %60 : vector<1x8x256xf32> to vector<8x256xf32>
    %c0_41 = arith.constant 0 : index
    %c0_42 = arith.constant 0 : index
    %c0_43 = arith.constant 0 : index
    %62 = vector.load %arg6[%c0_41, %c0_42, %c0_43] : memref<1x8x256xf32, #tpu.memory_space<vmem>>, vector<1x8x256xf32>
    %63 = vector.shape_cast %62 : vector<1x8x256xf32> to vector<8x256xf32>
    %64 = arith.subf %63, %48 : vector<8x256xf32>
    %65 = vector.broadcast %0 : f32 to vector<8x256xf32>
    %66 = arith.mulf %65, %64 : vector<8x256xf32>
    %67 = arith.addf %61, %66 : vector<8x256xf32>
    %c0_44 = arith.constant 0 : index
    %c0_45 = arith.constant 0 : index
    %c0_46 = arith.constant 0 : index
    %68 = vector.load %arg12[%c0_44, %c0_45, %c0_46] : memref<1x8x256xf32, #tpu.memory_space<vmem>>, vector<1x8x256xf32>
    %69 = vector.shape_cast %68 : vector<1x8x256xf32> to vector<8x256xf32>
    %70 = vector.shape_cast %67 : vector<8x256xf32> to vector<1x8x256xf32>
    tpu.vector_store %arg12[%c0_44, %c0_45, %c0_46], %70 {strides = array<i32>} : memref<1x8x256xf32, #tpu.memory_space<vmem>>, vector<1x8x256xf32>,
    return
  }
  func.func @transform_0(%arg0: i32) -> (i32, i32) {
    %c0_i32 = arith.constant 0 : i32
    %c0_i32_0 = arith.constant 0 : i32
    %c0_i32_1 = arith.constant 0 : i32
    return %c0_i32, %c0_i32_0 : i32, i32
  }
  func.func @transform_1(%arg0: i32) -> (i32, i32, i32) {
    %c0_i32 = arith.constant 0 : i32
    %c0_i32_0 = arith.constant 0 : i32
    %c0_i32_1 = arith.constant 0 : i32
    return %arg0, %c0_i32, %c0_i32_0 : i32, i32, i32
  }
  func.func @transform_2(%arg0: i32) -> (i32, i32, i32) {
    %c0_i32 = arith.constant 0 : i32
    %c0_i32_0 = arith.constant 0 : i32
    %c0_i32_1 = arith.constant 0 : i32
    return %arg0, %c0_i32, %c0_i32_0 : i32, i32, i32
  }
  func.func @transform_3(%arg0: i32) -> (i32, i32, i32) {
    %c0_i32 = arith.constant 0 : i32
    %c0_i32_0 = arith.constant 0 : i32
    %c0_i32_1 = arith.constant 0 : i32
    return %arg0, %c0_i32, %c0_i32_0 : i32, i32, i32
  }
  func.func @transform_4(%arg0: i32) -> (i32, i32, i32) {
    %c0_i32 = arith.constant 0 : i32
    %c0_i32_0 = arith.constant 0 : i32
    %c0_i32_1 = arith.constant 0 : i32
    return %arg0, %c0_i32, %c0_i32_0 : i32, i32, i32
  }
  func.func @transform_5(%arg0: i32) -> (i32, i32, i32) {
    %c0_i32 = arith.constant 0 : i32
    %c0_i32_0 = arith.constant 0 : i32
    %c0_i32_1 = arith.constant 0 : i32
    return %arg0, %c0_i32, %c0_i32_0 : i32, i32, i32
  }
  func.func @transform_6(%arg0: i32) -> (i32, i32, i32) {
    %c0_i32 = arith.constant 0 : i32
    %c0_i32_0 = arith.constant 0 : i32
    %c0_i32_1 = arith.constant 0 : i32
    return %arg0, %c0_i32, %c0_i32_0 : i32, i32, i32
  }
  func.func @transform_7(%arg0: i32) -> (i32, i32, i32) {
    %c0_i32 = arith.constant 0 : i32
    %c0_i32_0 = arith.constant 0 : i32
    %c0_i32_1 = arith.constant 0 : i32
    return %arg0, %c0_i32, %c0_i32_0 : i32, i32, i32
  }
  func.func @transform_8(%arg0: i32) -> (i32, i32, i32) {
    %c0_i32 = arith.constant 0 : i32
    %c0_i32_0 = arith.constant 0 : i32
    %c0_i32_1 = arith.constant 0 : i32
    return %arg0, %c0_i32, %c0_i32_0 : i32, i32, i32
  }
  func.func @transform_9(%arg0: i32) -> i32 {
    %c0_i32 = arith.constant 0 : i32
    %c0_i32_0 = arith.constant 0 : i32
    return %c0_i32 : i32
  }
  func.func @transform_10(%arg0: i32) -> (i32, i32, i32) {
    %c0_i32 = arith.constant 0 : i32
    %c0_i32_0 = arith.constant 0 : i32
    %c0_i32_1 = arith.constant 0 : i32
    return %arg0, %c0_i32, %c0_i32_0 : i32, i32, i32
  }
  func.func @transform_11(%arg0: i32) -> (i32, i32, i32) {
    %c0_i32 = arith.constant 0 : i32
    %c0_i32_0 = arith.constant 0 : i32
    %c0_i32_1 = arith.constant 0 : i32
    return %arg0, %c0_i32, %c0_i32_0 : i32, i32, i32
  }
}

</mosaic_0001>

<llo_original>
// kernel: _forward.1
$region0: #{_forward.1}
  #allocation0 [shape = 'u32[]', space=smem, size = 0x4, offset = 0x4, fixed_abs, tag = 'smem constant byte address 0x4 - core index']
  #allocation1 [shape = 'u32[144,128]{1,0:T(1,128)}', space=vmem, size = 0x12000, scoped, tag = 'internal scratch']
  #allocation2 [shape = 'f32[1]{0:T(128)S(6)}', space=smem, size = 0x200, scoped, tag = 'scoped memory for _forward.1']
  %s0 = inlined_call_operand.vmem [shape: f32[4,256], index: 0, kind: input, shape index: {}]
  %s1 = inlined_call_operand.vmem [shape: f32[2,8,256], index: 1, kind: input, shape index: {}]
  %s2 = inlined_call_operand.vmem [shape: f32[2,2,256], index: 2, kind: input, shape index: {}]
  %s3 = inlined_call_operand.vmem [shape: f32[2,2,256], index: 3, kind: input, shape index: {}]
  %s4 = inlined_call_operand.vmem [shape: f32[2,8,256], index: 4, kind: input, shape index: {}]
  %s5 = inlined_call_operand.vmem [shape: f32[2,8,256], index: 5, kind: input, shape index: {}]
  %s6 = inlined_call_operand.vmem [shape: f32[2,2,256], index: 6, kind: input, shape index: {}]
  %s7 = inlined_call_operand.vmem [shape: f32[2,2,256], index: 7, kind: input, shape index: {}]
  %s8 = inlined_call_operand.vmem [shape: f32[2,8,256], index: 8, kind: input, shape index: {}]
  %s9 = inlined_call_operand.<no memory space> [shape: f32[1], index: 9, kind: input, shape index: {}]
  %s10 = inlined_call_operand.vmem [shape: f32[2,8,256], index: 10, kind: output, shape index: {0}]
  %s11 = inlined_call_operand.vmem [shape: f32[2,8,256], index: 11, kind: output, shape index: {1}]
  %12 = xla_tuple %s10, %s11
  %s13 = sld [smem:[#allocation0]]
  $region81: #{_forward.1} parent=0
    _
  %s15 = ssub.s32 1, %s13
  %s16 = scalar_select 0, %s15, %s13
  %17 = sst [smem:[#allocation2]] %s9
  loop: start=0, step=1, limit=4
  $region2: #{_forward.1} parent=0 // loop_pre_header
    _
  $region3: #{_forward.1} parent=0 // loop_header
    %s19 = sphi 0, %s23
    %p20 = scmp.ge.s32.totalorder %s19, 4
    %s27 = sphi 0, %s27
    %s29 = sphi 0, %s27
    %s30 = sphi 0, %s29
    %s44 = sphi 0, %s30
    %s50 = sphi 0, %s52
    %s53 = sphi 0, %s50
    %s54 = sphi 0, %s53
    %s70 = sphi 0, %s54
    %s76 = sphi 0, %s78
    %s79 = sphi 0, %s76
    %s80 = sphi 0, %s79
    %s96 = sphi 0, %s80
    %s102 = sphi 0, %s104
    %s105 = sphi 0, %s102
    %s106 = sphi 0, %s105
    %s122 = sphi 0, %s106
    %s128 = sphi 0, %s130
    %s131 = sphi 0, %s128
    %s132 = sphi 0, %s131
    %s148 = sphi 0, %s132
    %s154 = sphi 0, %s156
    %s157 = sphi 0, %s154
    %s158 = sphi 0, %s157
    %s174 = sphi 0, %s158
    %s180 = sphi 0, %s182
    %s183 = sphi 0, %s180
    %s184 = sphi 0, %s183
    %s200 = sphi 0, %s184
    %s206 = sphi 0, %s208
    %s209 = sphi 0, %s206
    %s210 = sphi 0, %s209
    %s226 = sphi 0, %s210
    %s232 = sphi 0, %s234
    %s235 = sphi 0, %s232
    %s236 = sphi 0, %s235
    %s252 = sphi 0, %s236
    %s256 = sphi 0, %s256
    %s258 = sphi 0, %s256
    %s259 = sphi 0, %s258
    %s273 = sphi 0, %s259
    %s279 = sphi 0, %s281
    %s282 = sphi 0, %s279
    %s283 = sphi 0, %s282
    %s299 = sphi 0, %s283
    %s305 = sphi 0, %s307
    %s308 = sphi 0, %s305
    %s309 = sphi 0, %s308
    %s325 = sphi 0, %s309
  $region4: #{_forward.1} parent=0 // loop_header_branch
    %22 = sbr.rel (%p20) target = $region8
  $region5: #{_forward.1} parent=0 // loop_body
    %s24 = ssub.s32 %s19, 1
    %s25 = ssub.s32 %s19, 2
    %s26 = sadd.s32 %s19, 1
    %s28 = sadd.s32 %s27, 1
    %p31 = scmp.eq.s32.totalorder %s19, 1
    %p32 = scmp.ne.s32.totalorder %s27, %s29
    %p33 = scmp.eq.s32.totalorder %s19, 0
    %p34 = por %p32, %p33
    %p35 = scmp.ne.s32.totalorder %s27, %s29
    %p36 = scmp.eq.s32.totalorder %s24, 1
    %p37 = por %p35, %p36
    %p38 = scmp.ne.s32.totalorder %s29, %s30
    %p39 = scmp.eq.s32.totalorder %s24, 0
    %p40 = por %p38, %p39
    %p41 = scmp.ne.s32.totalorder %s29, %s30
    %p42 = scmp.eq.s32.totalorder %s25, 1
    %p43 = por %p41, %p42
    %p45 = scmp.ne.s32.totalorder %s30, %s44
    %p46 = scmp.eq.s32.totalorder %s25, 0
    %p47 = por %p45, %p46
    %s48 = ssub.s32 %s19, %s26
    %p49 = scmp.eq.s32.totalorder %s48, 0
    %s51 = sadd.s32 %s50, 1
    %s52 = scalar_select %p49, %s50, %s51
    %p55 = pneg %p49
    %p56 = scmp.eq.s32.totalorder %s19, 1
    %p57 = por %p55, %p56
    %p58 = scmp.ne.s32.totalorder %s50, %s53
    %p59 = scmp.eq.s32.totalorder %s19, 0
    %p60 = por %p58, %p59
    %p61 = scmp.ne.s32.totalorder %s50, %s53
    %p62 = scmp.eq.s32.totalorder %s24, 1
    %p63 = por %p61, %p62
    %p64 = scmp.ne.s32.totalorder %s53, %s54
    %p65 = scmp.eq.s32.totalorder %s24, 0
    %p66 = por %p64, %p65
    %p67 = scmp.ne.s32.totalorder %s53, %s54
    %p68 = scmp.eq.s32.totalorder %s25, 1
    %p69 = por %p67, %p68
    %p71 = scmp.ne.s32.totalorder %s54, %s70
    %p72 = scmp.eq.s32.totalorder %s25, 0
    %p73 = por %p71, %p72
    %s74 = ssub.s32 %s19, %s26
    %p75 = scmp.eq.s32.totalorder %s74, 0
    %s77 = sadd.s32 %s76, 1
    %s78 = scalar_select %p75, %s76, %s77
    %p81 = pneg %p75
    %p82 = scmp.eq.s32.totalorder %s19, 1
    %p83 = por %p81, %p82
    %p84 = scmp.ne.s32.totalorder %s76, %s79
    %p85 = scmp.eq.s32.totalorder %s19, 0
    %p86 = por %p84, %p85
    %p87 = scmp.ne.s32.totalorder %s76, %s79
    %p88 = scmp.eq.s32.totalorder %s24, 1
    %p89 = por %p87, %p88
    %p90 = scmp.ne.s32.totalorder %s79, %s80
    %p91 = scmp.eq.s32.totalorder %s24, 0
    %p92 = por %p90, %p91
    %p93 = scmp.ne.s32.totalorder %s79, %s80
    %p94 = scmp.eq.s32.totalorder %s25, 1
    %p95 = por %p93, %p94
    %p97 = scmp.ne.s32.totalorder %s80, %s96
    %p98 = scmp.eq.s32.totalorder %s25, 0
    %p99 = por %p97, %p98
    %s100 = ssub.s32 %s19, %s26
    %p101 = scmp.eq.s32.totalorder %s100, 0
    %s103 = sadd.s32 %s102, 1
    %s104 = scalar_select %p101, %s102, %s103
    %p107 = pneg %p101
    %p108 = scmp.eq.s32.totalorder %s19, 1
    %p109 = por %p107, %p108
    %p110 = scmp.ne.s32.totalorder %s102, %s105
    %p111 = scmp.eq.s32.totalorder %s19, 0
    %p112 = por %p110, %p111
    %p113 = scmp.ne.s32.totalorder %s102, %s105
    %p114 = scmp.eq.s32.totalorder %s24, 1
    %p115 = por %p113, %p114
    %p116 = scmp.ne.s32.totalorder %s105, %s106
    %p117 = scmp.eq.s32.totalorder %s24, 0
    %p118 = por %p116, %p117
    %p119 = scmp.ne.s32.totalorder %s105, %s106
    %p120 = scmp.eq.s32.totalorder %s25, 1
    %p121 = por %p119, %p120
    %p123 = scmp.ne.s32.totalorder %s106, %s122
    %p124 = scmp.eq.s32.totalorder %s25, 0
    %p125 = por %p123, %p124
    %s126 = ssub.s32 %s19, %s26
    %p127 = scmp.eq.s32.totalorder %s126, 0
    %s129 = sadd.s32 %s128, 1
    %s130 = scalar_select %p127, %s128, %s129
    %p133 = pneg %p127
    %p134 = scmp.eq.s32.totalorder %s19, 1
    %p135 = por %p133, %p134
    %p136 = scmp.ne.s32.totalorder %s128, %s131
    %p137 = scmp.eq.s32.totalorder %s19, 0
    %p138 = por %p136, %p137
    %p139 = scmp.ne.s32.totalorder %s128, %s131
    %p140 = scmp.eq.s32.totalorder %s24, 1
    %p141 = por %p139, %p140
    %p142 = scmp.ne.s32.totalorder %s131, %s132
    %p143 = scmp.eq.s32.totalorder %s24, 0
    %p144 = por %p142, %p143
    %p145 = scmp.ne.s32.totalorder %s131, %s132
    %p146 = scmp.eq.s32.totalorder %s25, 1
    %p147 = por %p145, %p146
    %p149 = scmp.ne.s32.totalorder %s132, %s148
    %p150 = scmp.eq.s32.totalorder %s25, 0
    %p151 = por %p149, %p150
    %s152 = ssub.s32 %s19, %s26
    %p153 = scmp.eq.s32.totalorder %s152, 0
    %s155 = sadd.s32 %s154, 1
    %s156 = scalar_select %p153, %s154, %s155
    %p159 = pneg %p153
    %p160 = scmp.eq.s32.totalorder %s19, 1
    %p161 = por %p159, %p160
    %p162 = scmp.ne.s32.totalorder %s154, %s157
    %p163 = scmp.eq.s32.totalorder %s19, 0
    %p164 = por %p162, %p163
    %p165 = scmp.ne.s32.totalorder %s154, %s157
    %p166 = scmp.eq.s32.totalorder %s24, 1
    %p167 = por %p165, %p166
    %p168 = scmp.ne.s32.totalorder %s157, %s158
    %p169 = scmp.eq.s32.totalorder %s24, 0
    %p170 = por %p168, %p169
    %p171 = scmp.ne.s32.totalorder %s157, %s158
    %p172 = scmp.eq.s32.totalorder %s25, 1
    %p173 = por %p171, %p172
    %p175 = scmp.ne.s32.totalorder %s158, %s174
    %p176 = scmp.eq.s32.totalorder %s25, 0
    %p177 = por %p175, %p176
    %s178 = ssub.s32 %s19, %s26
    %p179 = scmp.eq.s32.totalorder %s178, 0
    %s181 = sadd.s32 %s180, 1
    %s182 = scalar_select %p179, %s180, %s181
    %p185 = pneg %p179
    %p186 = scmp.eq.s32.totalorder %s19, 1
    %p187 = por %p185, %p186
    %p188 = scmp.ne.s32.totalorder %s180, %s183
    %p189 = scmp.eq.s32.totalorder %s19, 0
    %p190 = por %p188, %p189
    %p191 = scmp.ne.s32.totalorder %s180, %s183
    %p192 = scmp.eq.s32.totalorder %s24, 1
    %p193 = por %p191, %p192
    %p194 = scmp.ne.s32.totalorder %s183, %s184
    %p195 = scmp.eq.s32.totalorder %s24, 0
    %p196 = por %p194, %p195
    %p197 = scmp.ne.s32.totalorder %s183, %s184
    %p198 = scmp.eq.s32.totalorder %s25, 1
    %p199 = por %p197, %p198
    %p201 = scmp.ne.s32.totalorder %s184, %s200
    %p202 = scmp.eq.s32.totalorder %s25, 0
    %p203 = por %p201, %p202
    %s204 = ssub.s32 %s19, %s26
    %p205 = scmp.eq.s32.totalorder %s204, 0
    %s207 = sadd.s32 %s206, 1
    %s208 = scalar_select %p205, %s206, %s207
    %p211 = pneg %p205
    %p212 = scmp.eq.s32.totalorder %s19, 1
    %p213 = por %p211, %p212
    %p214 = scmp.ne.s32.totalorder %s206, %s209
    %p215 = scmp.eq.s32.totalorder %s19, 0
    %p216 = por %p214, %p215
    %p217 = scmp.ne.s32.totalorder %s206, %s209
    %p218 = scmp.eq.s32.totalorder %s24, 1
    %p219 = por %p217, %p218
    %p220 = scmp.ne.s32.totalorder %s209, %s210
    %p221 = scmp.eq.s32.totalorder %s24, 0
    %p222 = por %p220, %p221
    %p223 = scmp.ne.s32.totalorder %s209, %s210
    %p224 = scmp.eq.s32.totalorder %s25, 1
    %p225 = por %p223, %p224
    %p227 = scmp.ne.s32.totalorder %s210, %s226
    %p228 = scmp.eq.s32.totalorder %s25, 0
    %p229 = por %p227, %p228
    %s230 = ssub.s32 %s19, %s26
    %p231 = scmp.eq.s32.totalorder %s230, 0
    %s233 = sadd.s32 %s232, 1
    %s234 = scalar_select %p231, %s232, %s233
    %p237 = pneg %p231
    %p238 = scmp.eq.s32.totalorder %s19, 1
    %p239 = por %p237, %p238
    %p240 = scmp.ne.s32.totalorder %s232, %s235
    %p241 = scmp.eq.s32.totalorder %s19, 0
    %p242 = por %p240, %p241
    %p243 = scmp.ne.s32.totalorder %s232, %s235
    %p244 = scmp.eq.s32.totalorder %s24, 1
    %p245 = por %p243, %p244
    %p246 = scmp.ne.s32.totalorder %s235, %s236
    %p247 = scmp.eq.s32.totalorder %s24, 0
    %p248 = por %p246, %p247
    %p249 = scmp.ne.s32.totalorder %s235, %s236
    %p250 = scmp.eq.s32.totalorder %s25, 1
    %p251 = por %p249, %p250
    %p253 = scmp.ne.s32.totalorder %s236, %s252
    %p254 = scmp.eq.s32.totalorder %s25, 0
    %p255 = por %p253, %p254
    %s257 = sadd.s32 %s256, 1
    %p260 = scmp.eq.s32.totalorder %s19, 1
    %p261 = scmp.ne.s32.totalorder %s256, %s258
    %p262 = scmp.eq.s32.totalorder %s19, 0
    %p263 = por %p261, %p262
    %p264 = scmp.ne.s32.totalorder %s256, %s258
    %p265 = scmp.eq.s32.totalorder %s24, 1
    %p266 = por %p264, %p265
    %p267 = scmp.ne.s32.totalorder %s258, %s259
    %p268 = scmp.eq.s32.totalorder %s24, 0
    %p269 = por %p267, %p268
    %p270 = scmp.ne.s32.totalorder %s258, %s259
    %p271 = scmp.eq.s32.totalorder %s25, 1
    %p272 = por %p270, %p271
    %p274 = scmp.ne.s32.totalorder %s259, %s273
    %p275 = scmp.eq.s32.totalorder %s25, 0
    %p276 = por %p274, %p275
    %s277 = ssub.s32 %s19, %s26
    %p278 = scmp.eq.s32.totalorder %s277, 0
    %s280 = sadd.s32 %s279, 1
    %s281 = scalar_select %p278, %s279, %s280
    %p284 = pneg %p278
    %p285 = scmp.eq.s32.totalorder %s19, 1
    %p286 = por %p284, %p285
    %p287 = scmp.ne.s32.totalorder %s279, %s282
    %p288 = scmp.eq.s32.totalorder %s19, 0
    %p289 = por %p287, %p288
    %p290 = scmp.ne.s32.totalorder %s279, %s282
    %p291 = scmp.eq.s32.totalorder %s24, 1
    %p292 = por %p290, %p291
    %p293 = scmp.ne.s32.totalorder %s282, %s283
    %p294 = scmp.eq.s32.totalorder %s24, 0
    %p295 = por %p293, %p294
    %p296 = scmp.ne.s32.totalorder %s282, %s283
    %p297 = scmp.eq.s32.totalorder %s25, 1
    %p298 = por %p296, %p297
    %p300 = scmp.ne.s32.totalorder %s283, %s299
    %p301 = scmp.eq.s32.totalorder %s25, 0
    %p302 = por %p300, %p301
    %s303 = ssub.s32 %s19, %s26
    %p304 = scmp.eq.s32.totalorder %s303, 0
    %s306 = sadd.s32 %s305, 1
    %s307 = scalar_select %p304, %s305, %s306
    %p310 = pneg %p304
    %p311 = scmp.eq.s32.totalorder %s19, 1
    %p312 = por %p310, %p311
    %p313 = scmp.ne.s32.totalorder %s305, %s308
    %p314 = scmp.eq.s32.totalorder %s19, 0
    %p315 = por %p313, %p314
    %p316 = scmp.ne.s32.totalorder %s305, %s308
    %p317 = scmp.eq.s32.totalorder %s24, 1
    %p318 = por %p316, %p317
    %p319 = scmp.ne.s32.totalorder %s308, %s309
    %p320 = scmp.eq.s32.totalorder %s24, 0
    %p321 = por %p319, %p320
    %p322 = scmp.ne.s32.totalorder %s308, %s309
    %p323 = scmp.eq.s32.totalorder %s25, 1
    %p324 = por %p322, %p323
    %p326 = scmp.ne.s32.totalorder %s309, %s325
    %p327 = scmp.eq.s32.totalorder %s25, 0
    %p328 = por %p326, %p327
    %p329 = scmp.le.s32.totalorder 1, %s19
    %p330 = scmp.lt.s32.totalorder %s19, 3
    %p331 = pnand %p329, %p330
    %p332 = pneg %p331
    // Predicated region
    $region9: #{_forward.1} parent=5 // pred_check
      _
    $region10: #{_forward.1} parent=5 // pred_check_branch
      %334 = sbr.rel (%p331) target = $region12
    $region11: #{_forward.1} parent=5 // pred_region
      %s335 = ssub.s32 %s19, 1
      // Predicated region
      $region13: #{_forward.1} parent=11 // pred_check
        %p336 = pneg %p40
      $region14: #{_forward.1} parent=11 // pred_check_branch
        %338 = sbr.rel (%p336) target = $region16
      $region15: #{_forward.1} parent=11 // pred_region
        _
      $region16: #{_forward.1} parent=11 // pred_fallthru
        _
      // Predicated region
      $region17: #{_forward.1} parent=11 // pred_check
        %p339 = pneg %p269
      $region18: #{_forward.1} parent=11 // pred_check_branch
        %341 = sbr.rel (%p339) target = $region20
      $region19: #{_forward.1} parent=11 // pred_region
        _
      $region20: #{_forward.1} parent=11 // pred_fallthru
        _
    $region12: #{_forward.1} parent=5 // pred_fallthru
      _
    %p342 = scmp.lt.s32.totalorder %s19, 2
    // Predicated region
    $region21: #{_forward.1} parent=5 // pred_check
      %p343 = pneg %p342
    $region22: #{_forward.1} parent=5 // pred_check_branch
      %345 = sbr.rel (%p343) target = $region24
    $region23: #{_forward.1} parent=5 // pred_region
      // Predicated region
      $region25: #{_forward.1} parent=23 // pred_check
        %p346 = pneg %p60
      $region26: #{_forward.1} parent=23 // pred_check_branch
        %348 = sbr.rel (%p346) target = $region28
      $region27: #{_forward.1} parent=23 // pred_region
        %p349 = scmp.lt.s32.totalorder %s19, 1
        %s350 = scalar_select %p349, %s19, 1
        %s351 = smul.addr %s350, 2
        %s352 = smul.addr %s351, 8
        %s353 = scalar_lea.vmem %s1, %s352
      $region28: #{_forward.1} parent=23 // pred_fallthru
        _
      // Predicated region
      $region29: #{_forward.1} parent=23 // pred_check
        %p354 = pneg %p86
      $region30: #{_forward.1} parent=23 // pred_check_branch
        %356 = sbr.rel (%p354) target = $region32
      $region31: #{_forward.1} parent=23 // pred_region
        %p357 = scmp.lt.s32.totalorder %s19, 1
        %s358 = scalar_select %p357, %s19, 1
        %s359 = smul.addr %s358, 2
        %s360 = smul.addr %s359, 2
        %s361 = scalar_lea.vmem %s2, %s360
      $region32: #{_forward.1} parent=23 // pred_fallthru
        _
      // Predicated region
      $region33: #{_forward.1} parent=23 // pred_check
        %p362 = pneg %p112
      $region34: #{_forward.1} parent=23 // pred_check_branch
        %364 = sbr.rel (%p362) target = $region36
      $region35: #{_forward.1} parent=23 // pred_region
        %p365 = scmp.lt.s32.totalorder %s19, 1
        %s366 = scalar_select %p365, %s19, 1
        %s367 = smul.addr %s366, 2
        %s368 = smul.addr %s367, 2
        %s369 = scalar_lea.vmem %s3, %s368
      $region36: #{_forward.1} parent=23 // pred_fallthru
        _
      // Predicated region
      $region37: #{_forward.1} parent=23 // pred_check
        %p370 = pneg %p138
      $region38: #{_forward.1} parent=23 // pred_check_branch
        %372 = sbr.rel (%p370) target = $region40
      $region39: #{_forward.1} parent=23 // pred_region
        %p373 = scmp.lt.s32.totalorder %s19, 1
        %s374 = scalar_select %p373, %s19, 1
        %s375 = smul.addr %s374, 2
        %s376 = smul.addr %s375, 8
        %s377 = scalar_lea.vmem %s4, %s376
      $region40: #{_forward.1} parent=23 // pred_fallthru
        _
      // Predicated region
      $region41: #{_forward.1} parent=23 // pred_check
        %p378 = pneg %p164
      $region42: #{_forward.1} parent=23 // pred_check_branch
        %380 = sbr.rel (%p378) target = $region44
      $region43: #{_forward.1} parent=23 // pred_region
        %p381 = scmp.lt.s32.totalorder %s19, 1
        %s382 = scalar_select %p381, %s19, 1
        %s383 = smul.addr %s382, 2
        %s384 = smul.addr %s383, 8
        %s385 = scalar_lea.vmem %s5, %s384
      $region44: #{_forward.1} parent=23 // pred_fallthru
        _
      // Predicated region
      $region45: #{_forward.1} parent=23 // pred_check
        %p386 = pneg %p190
      $region46: #{_forward.1} parent=23 // pred_check_branch
        %388 = sbr.rel (%p386) target = $region48
      $region47: #{_forward.1} parent=23 // pred_region
        %p389 = scmp.lt.s32.totalorder %s19, 1
        %s390 = scalar_select %p389, %s19, 1
        %s391 = smul.addr %s390, 2
        %s392 = smul.addr %s391, 2
        %s393 = scalar_lea.vmem %s6, %s392
      $region48: #{_forward.1} parent=23 // pred_fallthru
        _
      // Predicated region
      $region49: #{_forward.1} parent=23 // pred_check
        %p394 = pneg %p216
      $region50: #{_forward.1} parent=23 // pred_check_branch
        %396 = sbr.rel (%p394) target = $region52
      $region51: #{_forward.1} parent=23 // pred_region
        %p397 = scmp.lt.s32.totalorder %s19, 1
        %s398 = scalar_select %p397, %s19, 1
        %s399 = smul.addr %s398, 2
        %s400 = smul.addr %s399, 2
        %s401 = scalar_lea.vmem %s7, %s400
      $region52: #{_forward.1} parent=23 // pred_fallthru
        _
      // Predicated region
      $region53: #{_forward.1} parent=23 // pred_check
        %p402 = pneg %p242
      $region54: #{_forward.1} parent=23 // pred_check_branch
        %404 = sbr.rel (%p402) target = $region56
      $region55: #{_forward.1} parent=23 // pred_region
        %p405 = scmp.lt.s32.totalorder %s19, 1
        %s406 = scalar_select %p405, %s19, 1
        %s407 = smul.addr %s406, 2
        %s408 = smul.addr %s407, 8
        %s409 = scalar_lea.vmem %s8, %s408
      $region56: #{_forward.1} parent=23 // pred_fallthru
        _
    $region24: #{_forward.1} parent=5 // pred_fallthru
      _
    %p410 = scmp.le.s32.totalorder 1, %s19
    %p411 = scmp.lt.s32.totalorder %s19, 3
    %p412 = pnand %p410, %p411
    %p413 = pneg %p412
    // Predicated region
    $region57: #{_forward.1} parent=5 // pred_check
      _
    $region58: #{_forward.1} parent=5 // pred_check_branch
      %415 = sbr.rel (%p412) target = $region60
    $region59: #{_forward.1} parent=5 // pred_region
      %s416 = ssub.s32 %s19, 1
      %p417 = pneg %p40
      %p418 = pneg %p37
      %p419 = scmp.lt.s32.totalorder %s24, 1
      %s420 = scalar_select %p419, %s24, 1
      %s421 = smul.addr %s420, 2
      %s422 = smul.addr %s421, 8
      %s423 = scalar_lea.vmem %s1, %s422
      %p424 = pneg %p66
      %p425 = pneg %p63
      %p426 = scmp.lt.s32.totalorder %s24, 1
      %s427 = scalar_select %p426, %s24, 1
      %s428 = smul.addr %s427, 2
      %s429 = smul.addr %s428, 2
      %s430 = scalar_lea.vmem %s2, %s429
      %p431 = pneg %p92
      %p432 = pneg %p89
      %p433 = scmp.lt.s32.totalorder %s24, 1
      %s434 = scalar_select %p433, %s24, 1
      %s435 = smul.addr %s434, 2
      %s436 = smul.addr %s435, 2
      %s437 = scalar_lea.vmem %s3, %s436
      %p438 = pneg %p118
      %p439 = pneg %p115
      %p440 = scmp.lt.s32.totalorder %s24, 1
      %s441 = scalar_select %p440, %s24, 1
      %s442 = smul.addr %s441, 2
      %s443 = smul.addr %s442, 8
      %s444 = scalar_lea.vmem %s4, %s443
      %p445 = pneg %p144
      %p446 = pneg %p141
      %p447 = scmp.lt.s32.totalorder %s24, 1
      %s448 = scalar_select %p447, %s24, 1
      %s449 = smul.addr %s448, 2
      %s450 = smul.addr %s449, 8
      %s451 = scalar_lea.vmem %s5, %s450
      %p452 = pneg %p170
      %p453 = pneg %p167
      %p454 = scmp.lt.s32.totalorder %s24, 1
      %s455 = scalar_select %p454, %s24, 1
      %s456 = smul.addr %s455, 2
      %s457 = smul.addr %s456, 2
      %s458 = scalar_lea.vmem %s6, %s457
      %p459 = pneg %p196
      %p460 = pneg %p193
      %p461 = scmp.lt.s32.totalorder %s24, 1
      %s462 = scalar_select %p461, %s24, 1
      %s463 = smul.addr %s462, 2
      %s464 = smul.addr %s463, 2
      %s465 = scalar_lea.vmem %s7, %s464
      %p466 = pneg %p222
      %p467 = pneg %p219
      %p468 = scmp.lt.s32.totalorder %s24, 1
      %s469 = scalar_select %p468, %s24, 1
      %s470 = smul.addr %s469, 2
      %s471 = smul.addr %s470, 8
      %s472 = scalar_lea.vmem %s8, %s471
      %p473 = pneg %p248
      %p474 = pneg %p245
      %p475 = pneg %p269
      %p476 = pneg %p266
      %p477 = pneg %p295
      %p478 = pneg %p292
      %p479 = scmp.lt.s32.totalorder %s24, 1
      %s480 = scalar_select %p479, %s24, 1
      %s481 = smul.addr %s480, 2
      %s482 = smul.addr %s481, 8
      %s483 = scalar_lea.vmem %s10, %s482
      %p484 = pneg %p321
      %p485 = pneg %p318
      %p486 = scmp.lt.s32.totalorder %s24, 1
      %s487 = scalar_select %p486, %s24, 1
      %s488 = smul.addr %s487, 2
      %s489 = smul.addr %s488, 8
      %s490 = scalar_lea.vmem %s11, %s489
      %p491 = scmp.lt.s32.totalorder %s24, 1
      %s492 = scalar_select %p491, %s24, 1
      %s493 = smul.addr %s492, 2
      %s494 = smul.addr %s493, 8
      %s495 = scalar_lea.vmem %s1, %s494
      %p496 = scmp.lt.s32.totalorder %s24, 1
      %s497 = scalar_select %p496, %s24, 1
      %s498 = smul.addr %s497, 2
      %s499 = smul.addr %s498, 2
      %s500 = scalar_lea.vmem %s2, %s499
      %p501 = scmp.lt.s32.totalorder %s24, 1
      %s502 = scalar_select %p501, %s24, 1
      %s503 = smul.addr %s502, 2
      %s504 = smul.addr %s503, 2
      %s505 = scalar_lea.vmem %s3, %s504
      %p506 = scmp.lt.s32.totalorder %s24, 1
      %s507 = scalar_select %p506, %s24, 1
      %s508 = smul.addr %s507, 2
      %s509 = smul.addr %s508, 8
      %s510 = scalar_lea.vmem %s4, %s509
      %p511 = scmp.lt.s32.totalorder %s24, 1
      %s512 = scalar_select %p511, %s24, 1
      %s513 = smul.addr %s512, 2
      %s514 = smul.addr %s513, 8
      %s515 = scalar_lea.vmem %s5, %s514
      %p516 = scmp.lt.s32.totalorder %s24, 1
      %s517 = scalar_select %p516, %s24, 1
      %s518 = smul.addr %s517, 2
      %s519 = smul.addr %s518, 2
      %s520 = scalar_lea.vmem %s6, %s519
      %p521 = scmp.lt.s32.totalorder %s24, 1
      %s522 = scalar_select %p521, %s24, 1
      %s523 = smul.addr %s522, 2
      %s524 = smul.addr %s523, 2
      %s525 = scalar_lea.vmem %s7, %s524
      %p526 = scmp.lt.s32.totalorder %s24, 1
      %s527 = scalar_select %p526, %s24, 1
      %s528 = smul.addr %s527, 2
      %s529 = smul.addr %s528, 8
      %s530 = scalar_lea.vmem %s8, %s529
      %p531 = scmp.lt.s32.totalorder %s24, 1
      %s532 = scalar_select %p531, %s24, 1
      %s533 = smul.addr %s532, 2
      %s534 = smul.addr %s533, 8
      %s535 = scalar_lea.vmem %s10, %s534
      %p536 = scmp.lt.s32.totalorder %s24, 1
      %s537 = scalar_select %p536, %s24, 1
      %s538 = smul.addr %s537, 2
      %s539 = smul.addr %s538, 8
      %s540 = scalar_lea.vmem %s11, %s539
      %s541 = sld [smem:[#allocation2]]
      %v542 = vld [vmem:[%s500] sm:$0xf]
      %v543 = vld [vmem:[%s505] sm:$0xf]
      %v544 = vld [vmem:[%s0] ss:$4 sm:$0x3]
      %v547 = vunpack.c.l.s4 1983009808
      %v548 = vunpack.c.0.s8 %v547
      %v549 = vlaneseq
      %v550 = vshrl.u32 %v549, 7
      %v551 = vsub.s32 %v548, %v550
      %v552 = vrot.slane %v542, %v551
      %v553 = vcombine.high %v552, %v552
      %556 = vrot.lane.b32.xlu0 %v552, 112
      %v557 = vpop.permute.xlu0 %556
      %558 = vrot.lane.b32.xlu0 %v553, 112
      %v559 = vpop.permute.xlu0 %558
      %v560 = vlaneseq
      %v561 = vand.u32 %v560, 127
      %vm562 = vcmp.lt.s32.totalorder %v561, 112
      %v563 = vsel %vm562, %v557, %v559
      %v564 = vsel %vm562, %v559, %v557
      %v566 = vlaneseq
      %v567 = vshrl.u32 %v566, 7
      %v568 = vsub.s32 0, %v567
      %v569 = vrot.slane %v544, %v568
      %v570 = vlaneseq
      %v571 = vshrl.u32 %v570, 7
      %v572 = vsub.s32 1, %v571
      %v573 = vrot.slane %v544, %v572
      %v576 = vmul.f32 %v569, %v563
      %v577 = vmul.f32 %v573, %v564
      %s578 = scalar_lea.vmem %s0, 1
      %v579 = vld [vmem:[%s578] ss:$4 sm:$0x3]
      %580 = vrot.lane.b32.xlu0 %v552, 16
      %v581 = vpop.permute.xlu0 %580
      %582 = vrot.lane.b32.xlu0 %v553, 16
      %v583 = vpop.permute.xlu0 %582
      %vm584 = vcmp.lt.s32.totalorder %v561, 16
      %v585 = vsel %vm584, %v581, %v583
      %v586 = vsel %vm584, %v583, %v581
      %v588 = vlaneseq
      %v589 = vshrl.u32 %v588, 7
      %v590 = vsub.s32 0, %v589
      %v591 = vrot.slane %v579, %v590
      %v592 = vlaneseq
      %v593 = vshrl.u32 %v592, 7
      %v594 = vsub.s32 1, %v593
      %v595 = vrot.slane %v579, %v594
      %v598 = vmul.f32 %v591, %v586
      %v599 = vmul.f32 %v595, %v585
      %v600 = vadd.f32 %v576, %v598
      %v601 = vadd.f32 %v577, %v599
      %s602 = scalar_lea.vmem %s0, 2
      %v603 = vld [vmem:[%s602] ss:$4 sm:$0x3]
      %v606 = vunpack.c.l.s4 1983009808
      %v607 = vunpack.c.0.s8 %v606
      %v608 = vlaneseq
      %v609 = vshrl.u32 %v608, 7
      %v610 = vsub.s32 %v607, %v609
      %v611 = vrot.slane %v543, %v610
      %v612 = vcombine.high %v611, %v611
      %615 = vrot.lane.b32.xlu0 %v611, 127
      %v616 = vpop.permute.xlu0 %615
      %617 = vrot.lane.b32.xlu0 %v612, 127
      %v618 = vpop.permute.xlu0 %617
      %vm619 = vcmp.lt.s32.totalorder %v561, 127
      %v620 = vsel %vm619, %v616, %v618
      %v621 = vsel %vm619, %v618, %v616
      %v623 = vlaneseq
      %v624 = vshrl.u32 %v623, 7
      %v625 = vsub.s32 0, %v624
      %v626 = vrot.slane %v603, %v625
      %v627 = vlaneseq
      %v628 = vshrl.u32 %v627, 7
      %v629 = vsub.s32 1, %v628
      %v630 = vrot.slane %v603, %v629
      %v633 = vmul.f32 %v626, %v620
      %v634 = vmul.f32 %v630, %v621
      %s635 = scalar_lea.vmem %s0, 3
      %v636 = vld [vmem:[%s635] ss:$4 sm:$0x3]
      %637 = vrot.lane.b32.xlu0 %v611, 1
      %v638 = vpop.permute.xlu0 %637
      %639 = vrot.lane.b32.xlu0 %v612, 1
      %v640 = vpop.permute.xlu0 %639
      %vm641 = vcmp.lt.s32.totalorder %v561, 1
      %v642 = vsel %vm641, %v638, %v640
      %v643 = vsel %vm641, %v640, %v638
      %v645 = vlaneseq
      %v646 = vshrl.u32 %v645, 7
      %v647 = vsub.s32 0, %v646
      %v648 = vrot.slane %v636, %v647
      %v649 = vlaneseq
      %v650 = vshrl.u32 %v649, 7
      %v651 = vsub.s32 1, %v650
      %v652 = vrot.slane %v636, %v651
      %v655 = vmul.f32 %v648, %v643
      %v656 = vmul.f32 %v652, %v642
      %v657 = vadd.f32 %v633, %v655
      %v658 = vadd.f32 %v634, %v656
      %v659 = vadd.f32 %v600, %v657
      %v660 = vadd.f32 %v601, %v658
      %v661 = vld [vmem:[%s520] sm:$0xf]
      %v662 = vld [vmem:[%s525] sm:$0xf]
      %v665 = vunpack.c.l.s4 1983009808
      %v666 = vunpack.c.0.s8 %v665
      %v667 = vlaneseq
      %v668 = vshrl.u32 %v667, 7
      %v669 = vsub.s32 %v666, %v668
      %v670 = vrot.slane %v661, %v669
      %v671 = vcombine.high %v670, %v670
      %674 = vrot.lane.b32.xlu0 %v670, 112
      %v675 = vpop.permute.xlu0 %674
      %676 = vrot.lane.b32.xlu0 %v671, 112
      %v677 = vpop.permute.xlu0 %676
      %v678 = vsel %vm562, %v675, %v677
      %v679 = vsel %vm562, %v677, %v675
      %v680 = vmul.f32 %v569, %v678
      %v681 = vmul.f32 %v573, %v679
      %682 = vrot.lane.b32.xlu0 %v670, 16
      %v683 = vpop.permute.xlu0 %682
      %684 = vrot.lane.b32.xlu0 %v671, 16
      %v685 = vpop.permute.xlu0 %684
      %v686 = vsel %vm584, %v683, %v685
      %v687 = vsel %vm584, %v685, %v683
      %v688 = vmul.f32 %v591, %v687
      %v689 = vmul.f32 %v595, %v686
      %v690 = vadd.f32 %v680, %v688
      %v691 = vadd.f32 %v681, %v689
      %v694 = vunpack.c.l.s4 1983009808
      %v695 = vunpack.c.0.s8 %v694
      %v696 = vlaneseq
      %v697 = vshrl.u32 %v696, 7
      %v698 = vsub.s32 %v695, %v697
      %v699 = vrot.slane %v662, %v698
      %v700 = vcombine.high %v699, %v699
      %703 = vrot.lane.b32.xlu0 %v699, 127
      %v704 = vpop.permute.xlu0 %703
      %705 = vrot.lane.b32.xlu0 %v700, 127
      %v706 = vpop.permute.xlu0 %705
      %v707 = vsel %vm619, %v704, %v706
      %v708 = vsel %vm619, %v706, %v704
      %v709 = vmul.f32 %v626, %v707
      %v710 = vmul.f32 %v630, %v708
      %711 = vrot.lane.b32.xlu0 %v699, 1
      %v712 = vpop.permute.xlu0 %711
      %713 = vrot.lane.b32.xlu0 %v700, 1
      %v714 = vpop.permute.xlu0 %713
      %v715 = vsel %vm641, %v712, %v714
      %v716 = vsel %vm641, %v714, %v712
      %v717 = vmul.f32 %v648, %v716
      %v718 = vmul.f32 %v652, %v715
      %v719 = vadd.f32 %v709, %v717
      %v720 = vadd.f32 %v710, %v718
      %v721 = vadd.f32 %v690, %v719
      %v722 = vadd.f32 %v691, %v720
      %v725 = vrot.slane %v659, 6
      %v726 = vrot.slane %v660, 6
      %v729 = vrot.slane %v659, 4
      %v730 = vrot.slane %v660, 4
      %v733 = vrot.slane %v659, 2
      %v734 = vrot.slane %v660, 2
      %vm737 = vcmask 1041408
      %v738 = vsel %vm737, %v659, %v725
      %v739 = vsel %vm737, %v660, %v726
      %vm740 = vcmask 1043456
      %v741 = vsel %vm740, %v738, %v729
      %v742 = vsel %vm740, %v739, %v730
      %vm743 = vcmask 1045504
      %v744 = vsel %vm743, %v741, %v733
      %v745 = vsel %vm743, %v742, %v734
      %v748 = vrot.slane %v721, 6
      %v749 = vrot.slane %v722, 6
      %v752 = vrot.slane %v721, 4
      %v753 = vrot.slane %v722, 4
      %v756 = vrot.slane %v721, 2
      %v757 = vrot.slane %v722, 2
      %v760 = vsel %vm737, %v721, %v748
      %v761 = vsel %vm737, %v722, %v749
      %v762 = vsel %vm740, %v760, %v752
      %v763 = vsel %vm740, %v761, %v753
      %v764 = vsel %vm743, %v762, %v756
      %v765 = vsel %vm743, %v763, %v757
      %v766 = vld [vmem:[%s510] sm:$0xff]
      %v767 = vld [vmem:[%s510 + $0x8] sm:$0xff]
      %v768 = vld [vmem:[%s495] sm:$0xff]
      %v769 = vld [vmem:[%s495 + $0x8] sm:$0xff]
      %v770 = vsub.f32 %v768, %v744
      %v771 = vsub.f32 %v769, %v745
      %v772 = vstv %s541
      %v773 = vmul.f32 %v772, %v770
      %v774 = vmul.f32 %v772, %v771
      %v775 = vsub.f32 %v766, %v773
      %v776 = vsub.f32 %v767, %v774
      %777 = vst [vmem:[%s535] sm:$0xff] %v775
      %778 = vst [vmem:[%s535 + $0x8] sm:$0xff] %v776
      %v779 = vld [vmem:[%s530] sm:$0xff]
      %v780 = vld [vmem:[%s530 + $0x8] sm:$0xff]
      %v781 = vld [vmem:[%s515] sm:$0xff]
      %v782 = vld [vmem:[%s515 + $0x8] sm:$0xff]
      %v783 = vsub.f32 %v781, %v764
      %v784 = vsub.f32 %v782, %v765
      %v785 = vmul.f32 %v772, %v783
      %v786 = vmul.f32 %v772, %v784
      %v787 = vadd.f32 %v779, %v785
      %v788 = vadd.f32 %v780, %v786
      %789 = vst [vmem:[%s540] sm:$0xff] %v787
      %790 = vst [vmem:[%s540 + $0x8] sm:$0xff] %v788
      %p791 = scmp.lt.s32.totalorder %s24, 1
      %s792 = scalar_select %p791, %s24, 1
      %s793 = smul.addr %s792, 2
      %s794 = smul.addr %s793, 8
      %s795 = scalar_lea.vmem %s10, %s794
      %p796 = scmp.lt.s32.totalorder %s24, 1
      %s797 = scalar_select %p796, %s24, 1
      %s798 = smul.addr %s797, 2
      %s799 = smul.addr %s798, 8
      %s800 = scalar_lea.vmem %s11, %s799
      // Predicated region
      $region61: #{_forward.1} parent=59 // pred_check
        %p801 = pneg %p292
      $region62: #{_forward.1} parent=59 // pred_check_branch
        %803 = sbr.rel (%p801) target = $region64
      $region63: #{_forward.1} parent=59 // pred_region
        _
      $region64: #{_forward.1} parent=59 // pred_fallthru
        _
      // Predicated region
      $region65: #{_forward.1} parent=59 // pred_check
        %p804 = pneg %p318
      $region66: #{_forward.1} parent=59 // pred_check_branch
        %806 = sbr.rel (%p804) target = $region68
      $region67: #{_forward.1} parent=59 // pred_region
        _
      $region68: #{_forward.1} parent=59 // pred_fallthru
        _
    $region60: #{_forward.1} parent=5 // pred_fallthru
      _
    %p807 = scmp.le.s32.totalorder 2, %s19
    // Predicated region
    $region69: #{_forward.1} parent=5 // pred_check
      %p808 = pneg %p807
    $region70: #{_forward.1} parent=5 // pred_check_branch
      %810 = sbr.rel (%p808) target = $region72
    $region71: #{_forward.1} parent=5 // pred_region
      %s811 = ssub.s32 %s19, 2
      // Predicated region
      $region73: #{_forward.1} parent=71 // pred_check
        %p812 = pneg %p298
      $region74: #{_forward.1} parent=71 // pred_check_branch
        %814 = sbr.rel (%p812) target = $region76
      $region75: #{_forward.1} parent=71 // pred_region
        %p815 = scmp.lt.s32.totalorder %s25, 1
        %s816 = scalar_select %p815, %s25, 1
        %s817 = smul.addr %s816, 2
        %s818 = smul.addr %s817, 8
        %s819 = scalar_lea.vmem %s10, %s818
      $region76: #{_forward.1} parent=71 // pred_fallthru
        _
      // Predicated region
      $region77: #{_forward.1} parent=71 // pred_check
        %p820 = pneg %p324
      $region78: #{_forward.1} parent=71 // pred_check_branch
        %822 = sbr.rel (%p820) target = $region80
      $region79: #{_forward.1} parent=71 // pred_region
        %p823 = scmp.lt.s32.totalorder %s25, 1
        %s824 = scalar_select %p823, %s25, 1
        %s825 = smul.addr %s824, 2
        %s826 = smul.addr %s825, 8
        %s827 = scalar_lea.vmem %s11, %s826
      $region80: #{_forward.1} parent=71 // pred_fallthru
        _
    $region72: #{_forward.1} parent=5 // pred_fallthru
      _
  $region6: #{_forward.1} parent=0 // loop_footer
    %s23 = sadd.s32 1, %s19
  $region7: #{_forward.1} parent=0 // loop_footer_branch
    %18 = sbr.rel target = $region3
  $region8: #{_forward.1} parent=0 // loop_exit
    _

</llo_original>
